<compile_context>
chip_gen: v5e
topology: v5e:2x2
jax: 0.10.0
libtpu: 0.0.40
codegen_flags: <defaults>
</compile_context>

<pallas_src>
from typing import NamedTuple

import jax
import jax.numpy as jnp
from jax.experimental import pallas as pl
from jax.experimental.pallas import tpu as pltpu


def _round_up(x, m):
    return ((x + m - 1) // m) * m


def _divisor_tile(total, granularity, max_tile):
    """Largest multiple of `granularity` that divides `total` and is <= max_tile.
    Falls back to `granularity` if nothing larger fits."""
    assert total % granularity == 0
    n = total // granularity
    best = 1
    for d in range(1, n + 1):
        if n % d == 0 and d * granularity <= max_tile:
            best = d
    return best * granularity


# ----------------------------------------------------------------------------
# Kernel
# ----------------------------------------------------------------------------
def _decoder_kernel(x_ref, w1_ref, b1_ref, w2_ref, o_ref):
    # x_ref : (TB, M)   bf16  batch tile of latent samples
    # w1_ref: (M, Hp)   bf16  first linear weight, (in, out) layout, H padded to 16
    # b1_ref: (1, Hp)   f32   first linear bias, zero-padded
    # w2_ref: (Hp, TR)  bf16  R-slice of second linear weight (padded H rows are 0)
    # o_ref : (TB, TR)  out   output tile
    #
    # Hidden activation is recomputed every grid step (cheap: extra MXU work is
    # ~M/r_tile of the main matmul) so no sequential-axis scratch is needed and
    # both grid axes can be parallel.
    h_pre = jnp.dot(x_ref[...], w1_ref[...],
                    preferred_element_type=jnp.float32) + b1_ref[...]
    # sigmoid via EUP: exp + approximate reciprocal (keeps VPU slots free).
    h = pl.reciprocal(1.0 + jnp.exp(-h_pre), approx=True)
    y = jnp.dot(h.astype(w2_ref.dtype), w2_ref[...],
                preferred_element_type=jnp.float32)
    o_ref[...] = jnp.clip(y, 0.0, 1.0).astype(o_ref.dtype)


# ----------------------------------------------------------------------------
# Parameter preparation (one-time; cache the result across calls)
# ----------------------------------------------------------------------------
class DecoderParams(NamedTuple):
    w1_p: jax.Array       # (M, H_pad)    bf16
    b1_p: jax.Array       # (1, H_pad)    f32
    w2_p: jax.Array       # (H_pad, R_pad) bf16 ; padded rows/cols are exactly 0
    hidden_dim: int
    reconstruct_dim: int


def prepare_decoder_params(w1_t, b1, w2_t):
    """One-time cast/pad of the decoder weights (hoisted out of the call path).
    w1_t: (manifold, hidden)   b1: (hidden,)   w2_t: (hidden, reconstruct)."""
    M, H = w1_t.shape
    H2, R = w2_t.shape
    assert H2 == H and b1.shape == (H,)
    H_pad = _round_up(H, 16)    # bf16 sublane granularity only -- NOT 128
    R_pad = _round_up(R, 128)   # lane granularity for dense stores
    w1_p = jnp.zeros((M, H_pad), jnp.bfloat16).at[:, :H].set(
        w1_t.astype(jnp.bfloat16))
    b1_p = jnp.zeros((1, H_pad), jnp.float32).at[0, :H].set(
        b1.astype(jnp.float32))
    # Invariant: padded hidden ROWS of W2 are exactly zero, so sigmoid(0)=0.5
    # on padded hidden lanes contributes nothing to the output.
    w2_p = jnp.zeros((H_pad, R_pad), jnp.bfloat16).at[:H, :R].set(
        w2_t.astype(jnp.bfloat16))
    return DecoderParams(w1_p, b1_p, w2_p, H, R)


# ----------------------------------------------------------------------------
# VMEM budgeting
# ----------------------------------------------------------------------------
def _vmem_budget_and_default_r_tile():
    try:
        cap = int(pltpu.get_tpu_info().vmem_capacity_bytes)
    except Exception:
        cap = 64 * 1024 * 1024
    if cap >= 100 * 1024 * 1024:
        # v5e / v6e class (128 MiB physical VMEM): deeper/larger W2 slices.
        return 100 * 1024 * 1024, 2048
    # v7x class (64 MiB physical VMEM) or unknown: leave headroom for
    # compiler-internal scratch.
    return 52 * 1024 * 1024, 1024


def _estimate_vmem(batch_tile, M, H_pad, r_tile, out_itemsize):
    lane = lambda n: _round_up(n, 128)
    est = 0
    est += 2 * _round_up(batch_tile, 16) * lane(M) * 2            # x tile (bf16), 2 bufs
    est += 2 * _round_up(M, 16) * lane(H_pad) * 2                 # W1 (bf16), tiny
    est += 2 * 8 * lane(H_pad) * 4                                # b1 (f32)
    est += 2 * _round_up(H_pad, 16) * r_tile * 2                  # W2 R-slice (bf16)
    est += 2 * _round_up(batch_tile, 8) * r_tile * out_itemsize   # out tile
    est += _round_up(batch_tile, 8) * lane(H_pad) * 4             # h_pre f32 temp
    est += _round_up(batch_tile, 16) * lane(H_pad) * 2            # sigmoid(h) bf16 temp
    return est


# ----------------------------------------------------------------------------
# Forward pass
# ----------------------------------------------------------------------------
def variational_image_curve_decoder_apply(params, x, *, out_dtype=jnp.float32,
                                          max_batch_tile=512, max_r_tile=None):
    """x: (B, manifold_dim) f32/bf16.  Returns (B, reconstruct_dim) out_dtype."""
    B, M = x.shape
    M_w, H_pad = params.w1_p.shape
    H_pad2, R_pad = params.w2_p.shape
    assert M_w == M and H_pad2 == H_pad
    R = params.reconstruct_dim

    vmem_budget, default_r_tile = _vmem_budget_and_default_r_tile()
    if max_r_tile is None:
        max_r_tile = default_r_tile

    # --- tile selection (divisor-based -> padding bounded by one group) ---
    B_pad = _round_up(B, 16)
    batch_tile = _divisor_tile(B_pad, 16, min(max_batch_tile, B_pad))
    r_tile = _divisor_tile(R_pad, 128, min(max_r_tile, R_pad))

    out_itemsize = jnp.dtype(out_dtype).itemsize
    # If over budget, shrink r_tile first (W2 slice + out tile dominate),
    # then batch_tile (large batch tiles matter most on v5e).
    while _estimate_vmem(batch_tile, M, H_pad, r_tile, out_itemsize) * 1.4 > vmem_budget:
        if r_tile > 128:
            r_tile = _divisor_tile(R_pad, 128, r_tile - 128)
        elif batch_tile > 16:
            batch_tile = _divisor_tile(B_pad, 16, batch_tile - 16)
        else:
            break
    est = _estimate_vmem(batch_tile, M, H_pad, r_tile, out_itemsize)
    vmem_limit = int(min(vmem_budget, max(32 * 1024 * 1024, est * 1.4)))

    # Only x is cast/padded per call (weights prepared once, cached by caller).
    if B_pad == B:
        x_p = x.astype(jnp.bfloat16)
    else:
        x_p = jnp.zeros((B_pad, M), jnp.bfloat16).at[:B, :].set(
            x.astype(jnp.bfloat16))

    # Batch is the INNERMOST axis: the W2 slice's block index is constant
    # across consecutive steps, so W2 is streamed from HBM once total.
    grid = (R_pad // r_tile, B_pad // batch_tile)

    out = pl.pallas_call(
        _decoder_kernel,
        out_shape=jax.ShapeDtypeStruct((B_pad, R_pad), out_dtype),
        grid_spec=pltpu.PrefetchScalarGridSpec(
            num_scalar_prefetch=0,
            grid=grid,
            in_specs=[
                pl.BlockSpec((batch_tile, M), lambda r, b: (b, 0)),   # x batch tile
                # W1 / b1 have constant block indices: fetched once and held
                # resident.  After the H->16 padding fix they are tiny, so the
                # default double buffer costs ~nothing.
                pl.BlockSpec((M, H_pad), lambda r, b: (0, 0)),        # W1
                pl.BlockSpec((1, H_pad), lambda r, b: (0, 0)),        # b1
                pl.BlockSpec((H_pad, r_tile), lambda r, b: (0, r)),   # W2 R-slice
            ],
            out_specs=pl.BlockSpec((batch_tile, r_tile), lambda r, b: (b, r)),
        ),
        compiler_params=pltpu.CompilerParams(
            # Both axes are independent (no accumulator, hidden recomputed per
            # step): on multi-core chips (v7x) the leading R axis is split
            # across TensorCores, using both cores' HBM bandwidth and MXUs.
            dimension_semantics=("parallel", "parallel"),
            vmem_limit_bytes=vmem_limit,
        ),
    )(x_p, params.w1_p, params.b1_p, params.w2_p)

    return out[:B, :R]


def variational_image_curve_decoder(x, w1_t, b1, w2_t, **kwargs):
    """One-shot convenience wrapper (prepare + apply).  For repeated calls,
    call prepare_decoder_params() once and reuse the result."""
    return variational_image_curve_decoder_apply(
        prepare_decoder_params(w1_t, b1, w2_t), x, **kwargs)


def _reference(x, w1_t, b1, w2_t):
    h = jax.nn.sigmoid(x @ w1_t + b1)
    return jnp.clip(h @ w2_t, 0.0, 1.0)


if __name__ == "__main__":
    # Small shapes consistent with the module:
    #   manifold_dimension=32, hidden_dim=64, reconstruct_dimension=128, batch=16
    key = jax.random.PRNGKey(0)
    k_x, k_w1, k_b1, k_w2 = jax.random.split(key, 4)

    B, M, H, R = 16, 32, 64, 128

    x = jax.random.normal(k_x, (B, M), dtype=jnp.float32)

    # Deterministic synthetic params (mimics nn.Linear's uniform fan-in scale).
    # Torch stores (out, in); we build directly in (in, out) layout.
    w1_t = jax.random.uniform(k_w1, (M, H), dtype=jnp.float32,
                              minval=-1.0, maxval=1.0) / jnp.sqrt(M)
    b1 = jax.random.uniform(k_b1, (H,), dtype=jnp.float32,
                            minval=-1.0, maxval=1.0) / jnp.sqrt(M)
    w2_t = jax.random.uniform(k_w2, (H, R), dtype=jnp.float32,
                              minval=-1.0, maxval=1.0) / jnp.sqrt(H)

    # Prepare (cast/pad) the weights once, then run the kernel.
    params = prepare_decoder_params(w1_t, b1, w2_t)
    out = variational_image_curve_decoder_apply(params, x)
    out = jax.block_until_ready(out)

    ref = _reference(x, w1_t, b1, w2_t)
    assert out.shape == (B, R), out.shape
    # bf16 weights/inputs + approx reciprocal -> loosened (but tight for bf16)
    # tolerance vs. the f32 reference.
    assert jnp.allclose(out, ref, atol=3e-2, rtol=3e-2), (
        "mismatch vs reference, max abs err = "
        f"{float(jnp.max(jnp.abs(out - ref)))}")

    print("KERNEL_OK")
</pallas_src>

<mosaic_0001>
module attributes {stable_mosaic.version = 11 : i64} {
  func.func @_decoder_kernel(%arg0: i32, %arg1: i32, %arg2: memref<16x32xbf16, #tpu.memory_space<vmem>>, %arg3: memref<32x64xbf16, #tpu.memory_space<vmem>>, %arg4: memref<1x64xf32, #tpu.memory_space<vmem>>, %arg5: memref<64x128xbf16, #tpu.memory_space<vmem>>, %arg6: memref<16x128xf32, #tpu.memory_space<vmem>>) attributes {dimension_semantics = [#tpu.dimension_semantics<parallel>, #tpu.dimension_semantics<parallel>], iteration_bounds = array<i64: 1, 1>, scalar_prefetch = 0 : i64, scratch_operands = 0 : i64, tpu.core_type = #tpu.core_type<tc>, window_params = [{transform_indices = @transform_0, window_bounds = array<i64: 16, 32>}, {pipeline_mode = #tpu.pipeline_mode<synchronous>, transform_indices = @transform_1, window_bounds = array<i64: 32, 64>}, {pipeline_mode = #tpu.pipeline_mode<synchronous>, transform_indices = @transform_2, window_bounds = array<i64: 1, 64>}, {transform_indices = @transform_3, window_bounds = array<i64: 64, 128>}, {transform_indices = @transform_4, window_bounds = array<i64: 16, 128>}]} {
    %c0 = arith.constant 0 : index
    %c0_0 = arith.constant 0 : index
    %0 = vector.load %arg2[%c0, %c0_0] : memref<16x32xbf16, #tpu.memory_space<vmem>>, vector<16x32xbf16>
    %c0_1 = arith.constant 0 : index
    %c0_2 = arith.constant 0 : index
    %1 = vector.load %arg3[%c0_1, %c0_2] : memref<32x64xbf16, #tpu.memory_space<vmem>>, vector<32x64xbf16>
    %cst = arith.constant dense<0.000000e+00> : vector<16x64xf32>
    %2 = tpu.matmul %0, %1, %cst {dimension_numbers = #tpu.dot_dimension_numbers<[1], [0], [0], [1], [0, 0, 1, 1], [], []>} : vector<16x32xbf16>, vector<32x64xbf16>, vector<16x64xf32> -> vector<16x64xf32>
    %c0_3 = arith.constant 0 : index
    %c0_4 = arith.constant 0 : index
    %3 = vector.load %arg4[%c0_3, %c0_4] : memref<1x64xf32, #tpu.memory_space<vmem>>, vector<1x64xf32>
    %4 = vector.broadcast %3 : vector<1x64xf32> to vector<16x64xf32>
    %5 = arith.addf %2, %4 : vector<16x64xf32>
    %cst_5 = arith.constant 0.000000e+00 : f32
    %6 = vector.broadcast %cst_5 : f32 to vector<16x64xf32>
    %7 = arith.subf %6, %5 : vector<16x64xf32>
    %8 = math.exp %7 : vector<16x64xf32>
    %cst_6 = arith.constant 1.000000e+00 : f32
    %9 = vector.broadcast %cst_6 : f32 to vector<16x64xf32>
    %10 = arith.addf %9, %8 : vector<16x64xf32>
    %11 = tpu.reciprocal %10 {approx = true} : vector<16x64xf32> -> vector<16x64xf32>
    %12 = arith.truncf %11 : vector<16x64xf32> to vector<16x64xbf16>
    %c0_7 = arith.constant 0 : index
    %c0_8 = arith.constant 0 : index
    %13 = vector.load %arg5[%c0_7, %c0_8] : memref<64x128xbf16, #tpu.memory_space<vmem>>, vector<64x128xbf16>
    %cst_9 = arith.constant dense<0.000000e+00> : vector<16x128xf32>
    %14 = tpu.matmul %12, %13, %cst_9 {dimension_numbers = #tpu.dot_dimension_numbers<[1], [0], [0], [1], [0, 0, 1, 1], [], []>} : vector<16x64xbf16>, vector<64x128xbf16>, vector<16x128xf32> -> vector<16x128xf32>
    %cst_10 = arith.constant 0.000000e+00 : f32
    %cst_11 = arith.constant 1.000000e+00 : f32
    %15 = vector.broadcast %cst_10 : f32 to vector<16x128xf32>
    %16 = arith.maximumf %15, %14 : vector<16x128xf32>
    %17 = vector.broadcast %cst_11 : f32 to vector<16x128xf32>
    %18 = arith.minimumf %17, %16 : vector<16x128xf32>
    %c0_12 = arith.constant 0 : index
    %c0_13 = arith.constant 0 : index
    %19 = vector.load %arg6[%c0_12, %c0_13] : memref<16x128xf32, #tpu.memory_space<vmem>>, vector<16x128xf32>
    tpu.vector_store %arg6[%c0_12, %c0_13], %18 {strides = array<i32>} : memref<16x128xf32, #tpu.memory_space<vmem>>, vector<16x128xf32>,
    return
  }
  func.func @transform_0(%arg0: i32, %arg1: i32) -> (i32, i32) {
    %c0_i32 = arith.constant 0 : i32
    %c0_i32_0 = arith.constant 0 : i32
    return %arg1, %c0_i32 : i32, i32
  }
  func.func @transform_1(%arg0: i32, %arg1: i32) -> (i32, i32) {
    %c0_i32 = arith.constant 0 : i32
    %c0_i32_0 = arith.constant 0 : i32
    %c0_i32_1 = arith.constant 0 : i32
    return %c0_i32, %c0_i32_0 : i32, i32
  }
  func.func @transform_2(%arg0: i32, %arg1: i32) -> (i32, i32) {
    %c0_i32 = arith.constant 0 : i32
    %c0_i32_0 = arith.constant 0 : i32
    %c0_i32_1 = arith.constant 0 : i32
    return %c0_i32, %c0_i32_0 : i32, i32
  }
  func.func @transform_3(%arg0: i32, %arg1: i32) -> (i32, i32) {
    %c0_i32 = arith.constant 0 : i32
    %c0_i32_0 = arith.constant 0 : i32
    return %c0_i32, %arg0 : i32, i32
  }
  func.func @transform_4(%arg0: i32, %arg1: i32) -> (i32, i32) {
    %c0_i32 = arith.constant 0 : i32
    return %arg1, %arg0 : i32, i32
  }
}

</mosaic_0001>

<llo_original>
// kernel: tpu_custom_call.1
$region0: #{tpu_custom_call.1}
  #allocation0 [shape = 'u32[]', space=smem, size = 0x4, offset = 0x4, fixed_abs, tag = 'smem constant byte address 0x4 - core index']
  #allocation1 [shape = 'u32[72,128]{1,0:T(1,128)}', space=vmem, size = 0x9000, scoped, tag = 'internal scratch']
  %s0 = inlined_call_operand.hbm [shape: bf16[16,32], index: 0, kind: input, shape index: {}]
  %s1 = inlined_call_operand.hbm [shape: bf16[32,64], index: 1, kind: input, shape index: {}]
  %s2 = inlined_call_operand.vmem [shape: f32[1,64], index: 2, kind: input, shape index: {}]
  %s3 = inlined_call_operand.hbm [shape: bf16[64,128], index: 3, kind: input, shape index: {}]
  %s4 = inlined_call_operand.hbm [shape: f32[16,128], index: 4, kind: output, shape index: {}]
  %s5 = sld [smem:[#allocation0]]
  $region38: #{tpu_custom_call.1} parent=0
    _
  %s7 = ssub.s32 1, %s5
  %s8 = scalar_select 0, %s7, %s5
  $region1: #{tpu_custom_call.1} parent=0
    #allocation2 [shape = 'u8[4096]{0}', space=vmem, size = 0x1000, scoped, tag = 'input window, operand 0, single buffered']
    #allocation3 [shape = 's32[1]{0}', space=sflag, size = 0x4, scoped, tag = 'scoped memory for tpu_custom_call.1']
    #allocation4 [shape = 's32[1]{0}', space=sflag, size = 0x4, scoped, tag = 'scoped memory for tpu_custom_call.1']
    #allocation5 [shape = 'u8[8192]{0}', space=vmem, size = 0x2000, scoped, tag = 'input window, operand 1, single buffered']
    #allocation6 [shape = 's32[1]{0}', space=sflag, size = 0x4, scoped, tag = 'scoped memory for tpu_custom_call.1']
    #allocation7 [shape = 'u8[16384]{0}', space=vmem, size = 0x4000, scoped, tag = 'input window, operand 3, single buffered']
    #allocation8 [shape = 'u8[8192]{0}', space=vmem, size = 0x2000, scoped, tag = 'output window, operand 0, single buffered']
    %9 = vsyncpa [#allocation3], 0
    %10 = vsyncpa [#allocation6], 0
    %11 = vsyncpa [#allocation4], 0
    // Predicated region
    $region2: #{tpu_custom_call.1} parent=1 // pred_check
      _
    $region3: #{tpu_custom_call.1} parent=1 // pred_check_branch
      %13 = sbr.rel (0) target = $region5
    $region4: #{tpu_custom_call.1} parent=1 // pred_region
      %15 = vsyncadd [#allocation3], 0
      %s16 = sshll.u32 %s0, 4
      %s17 = int_to_ptr.hbm [resolvable:$true] %s16
      %s18 = sshll.u32 [#allocation2], 4
      %s19 = int_to_ptr.vmem [resolvable:$true] %s18
      %24 = dma.hbm_to_vmem [thread:$0]  %s17, 128, %s19, [#allocation3], 64, 64, 4
    $region5: #{tpu_custom_call.1} parent=1 // pred_fallthru
      _
    // Predicated region
    $region6: #{tpu_custom_call.1} parent=1 // pred_check
      _
    $region7: #{tpu_custom_call.1} parent=1 // pred_check_branch
      %26 = sbr.rel (0) target = $region9
    $region8: #{tpu_custom_call.1} parent=1 // pred_region
      %28 = vsyncadd [#allocation6], 0
      %s29 = sshll.u32 %s1, 4
      %s30 = int_to_ptr.hbm [resolvable:$true] %s29
      %s31 = sshll.u32 [#allocation5], 4
      %s32 = int_to_ptr.vmem [resolvable:$true] %s31
      %37 = dma.hbm_to_vmem [thread:$0]  %s30, 256, %s32, [#allocation6], 64, 64, 4
    $region9: #{tpu_custom_call.1} parent=1 // pred_fallthru
      _
    // Predicated region
    $region10: #{tpu_custom_call.1} parent=1 // pred_check
      _
    $region11: #{tpu_custom_call.1} parent=1 // pred_check_branch
      %39 = sbr.rel (0) target = $region13
    $region12: #{tpu_custom_call.1} parent=1 // pred_region
      _
    $region13: #{tpu_custom_call.1} parent=1 // pred_fallthru
      _
    // Predicated region
    $region14: #{tpu_custom_call.1} parent=1 // pred_check
      _
    $region15: #{tpu_custom_call.1} parent=1 // pred_check_branch
      %41 = sbr.rel (0) target = $region17
    $region16: #{tpu_custom_call.1} parent=1 // pred_region
      %43 = vsyncadd [#allocation6], 0
      %s44 = sshll.u32 %s3, 4
      %s45 = int_to_ptr.hbm [resolvable:$true] %s44
      %s46 = sshll.u32 [#allocation7], 4
      %s47 = int_to_ptr.vmem [resolvable:$true] %s46
      %52 = dma.hbm_to_vmem [thread:$0]  %s45, 512, %s47, [#allocation6], 64, 64, 4
    $region17: #{tpu_custom_call.1} parent=1 // pred_fallthru
      _
    // Predicated region
    $region18: #{tpu_custom_call.1} parent=1 // pred_check
      _
    $region19: #{tpu_custom_call.1} parent=1 // pred_check_branch
      %54 = sbr.rel (0) target = $region21
    $region20: #{tpu_custom_call.1} parent=1 // pred_region
      %56 = dma.done [#allocation3], 128
    $region21: #{tpu_custom_call.1} parent=1 // pred_fallthru
      _
    // Predicated region
    $region22: #{tpu_custom_call.1} parent=1 // pred_check
      _
    $region23: #{tpu_custom_call.1} parent=1 // pred_check_branch
      %58 = sbr.rel (0) target = $region25
    $region24: #{tpu_custom_call.1} parent=1 // pred_region
      %60 = dma.done [#allocation6], 256
    $region25: #{tpu_custom_call.1} parent=1 // pred_fallthru
      _
    // Predicated region
    $region26: #{tpu_custom_call.1} parent=1 // pred_check
      _
    $region27: #{tpu_custom_call.1} parent=1 // pred_check_branch
      %62 = sbr.rel (0) target = $region29
    $region28: #{tpu_custom_call.1} parent=1 // pred_region
      %64 = dma.done [#allocation6], 512
    $region29: #{tpu_custom_call.1} parent=1 // pred_fallthru
      _
    %v66 = vld [vmem:[#allocation2] sm:$0xf]
    %v67 = vld [vmem:[#allocation2 + $0x4] sm:$0xf]
    %v68 = vld [vmem:[#allocation5] sm:$0xf]
    %v69 = vld [vmem:[#allocation5 + $0x4] sm:$0xf]
    %v70 = vld [vmem:[#allocation5 + $0x8] sm:$0xf]
    %v71 = vld [vmem:[#allocation5 + $0xc] sm:$0xf]
    %v72 = vld [vmem:[%s2] sm:$0x1]
    %v74 = vperm.slane %v72, 0
    %v78 = vunpack.c.l.b16 %v66
    %v79 = vunpack.c.l.b16 %v67
    %v80 = vpack.c.b16 %v79, %v78
    %v85 = vunpack.c.l.b16 %v68
    %v86 = vunpack.c.l.b16 %v69
    %v87 = vunpack.c.l.b16 %v70
    %v88 = vunpack.c.l.b16 %v71
    %v89 = vpack.c.b16 %v86, %v85
    %v90 = vpack.c.b16 %v88, %v87
    %vm93 = vcmask 261120
    %v95 = vsel %vm93, %v80, 0
    %97 = vmatpush.bf16.msra.mxu0 0
    %98 = vmatpush.bf16.msra.mxu0 0
    %99 = vmatpush.bf16.msra.mxu0 0
    %100 = vmatpush.bf16.msra.mxu0 0
    %101 = vmatpush.bf16.msra.mxu0 0
    %102 = vmatpush.bf16.msra.mxu0 0
    %103 = vmatpush.bf16.msra.mxu0 %v90
    %104 = vmatpush.bf16.msra.mxu0 %v89
    %105 = vmatmul.bf16.gmra.mxu0 %v95
    %v106 = vpop.f32.mrf.mxu0
    %v107 = vadd.f32 %v74, %v106
    %v108 = vpop.f32.mrf.mxu0
    %v109 = vadd.f32 %v74, %v108
    %110 = vdwg.mxu0
    %v111 = vsub.f32 0.0, %v107
    %v112 = vsub.f32 0.0, %v109
    %v113 = vmul.f32 %v111, 1.442695
    %v114 = vpow.pop %v113
    %v115 = vmul.f32 %v112, 1.442695
    %v116 = vpow.pop %v115
    %v117 = vadd.f32 %v114, 1.0
    %v118 = vadd.f32 %v116, 1.0
    %v119 = vrcp.pop %v117
    %v120 = vrcp.pop %v118
    %v121 = vpack.c.bf16 %v120, %v119
    %v122 = vld [vmem:[#allocation7] sm:$0xf]
    %v123 = vld [vmem:[#allocation7 + $0x4] sm:$0xf]
    %v124 = vld [vmem:[#allocation7 + $0x8] sm:$0xf]
    %v125 = vld [vmem:[#allocation7 + $0xc] sm:$0xf]
    %v126 = vld [vmem:[#allocation7 + $0x10] sm:$0xf]
    %v127 = vld [vmem:[#allocation7 + $0x14] sm:$0xf]
    %v128 = vld [vmem:[#allocation7 + $0x18] sm:$0xf]
    %v129 = vld [vmem:[#allocation7 + $0x1c] sm:$0xf]
    %v138 = vunpack.c.l.b16 %v122
    %v139 = vunpack.c.l.b16 %v123
    %v140 = vunpack.c.l.b16 %v124
    %v141 = vunpack.c.l.b16 %v125
    %v142 = vunpack.c.l.b16 %v126
    %v143 = vunpack.c.l.b16 %v127
    %v144 = vunpack.c.l.b16 %v128
    %v145 = vunpack.c.l.b16 %v129
    %v146 = vpack.c.b16 %v139, %v138
    %v147 = vpack.c.b16 %v141, %v140
    %v148 = vpack.c.b16 %v143, %v142
    %v149 = vpack.c.b16 %v145, %v144
    %vm154 = vcmask 523264
    %v156 = vsel %vm154, %v121, 0
    %158 = vmatpush.bf16.msra.mxu0 0
    %159 = vmatpush.bf16.msra.mxu0 0
    %160 = vmatpush.bf16.msra.mxu0 0
    %161 = vmatpush.bf16.msra.mxu0 0
    %162 = vmatpush.bf16.msra.mxu0 %v149
    %163 = vmatpush.bf16.msra.mxu0 %v148
    %164 = vmatpush.bf16.msra.mxu0 %v147
    %165 = vmatpush.bf16.msra.mxu0 %v146
    %166 = vmatmul.bf16.gmra.mxu0 %v156
    %v167 = vpop.f32.mrf.mxu0
    %v168 = vadd.f32 0.0, %v167
    %v169 = vpop.f32.mrf.mxu0
    %v170 = vadd.f32 0.0, %v169
    %171 = vdwg.mxu0
    %v172 = vmax.f32 %v168, 0.0
    %v173 = vmax.f32 %v170, 0.0
    %v174 = vmin.f32 %v172, 1.0
    %v175 = vmin.f32 %v173, 1.0
    %176 = vst [vmem:[#allocation8] sm:$0xff] %v174
    %177 = vst [vmem:[#allocation8 + $0x8] sm:$0xff] %v175
    // Predicated region
    $region30: #{tpu_custom_call.1} parent=1 // pred_check
      _
    $region31: #{tpu_custom_call.1} parent=1 // pred_check_branch
      %179 = sbr.rel (0) target = $region33
    $region32: #{tpu_custom_call.1} parent=1 // pred_region
      %181 = vsyncadd [#allocation4], 0
      %s182 = sshll.u32 [#allocation8], 4
      %s183 = int_to_ptr.vmem [resolvable:$true] %s182
      %s184 = sshll.u32 %s4, 4
      %s185 = int_to_ptr.hbm [resolvable:$true] %s184
      %190 = dma.vmem_to_hbm [thread:$0]  %s183, 256, %s185, [#allocation4], 128, 128, 8
    $region33: #{tpu_custom_call.1} parent=1 // pred_fallthru
      _
    // Predicated region
    $region34: #{tpu_custom_call.1} parent=1 // pred_check
      _
    $region35: #{tpu_custom_call.1} parent=1 // pred_check_branch
      %192 = sbr.rel (0) target = $region37
    $region36: #{tpu_custom_call.1} parent=1 // pred_region
      %194 = dma.done [#allocation4], 256
    $region37: #{tpu_custom_call.1} parent=1 // pred_fallthru
      _
    %195 = vsyncpa [#allocation3], 1
    %196 = vsyncpa [#allocation6], 1
    %197 = vsyncpa [#allocation4], 1

</llo_original>
